<compile_context>
chip_gen: v7x
topology: tpu7x:2x2x1
jax: 0.10.0
libtpu: 0.0.40
codegen_flags: <defaults>
</compile_context>

<pallas_src>
import functools

import jax
import jax.numpy as jnp
from jax import lax
from jax.experimental import pallas as pl
from jax.experimental.pallas import tpu as pltpu


def _round_up(x, m):
    return (x + m - 1) // m * m


def _fc_dropout_kernel(seed_ref, x_ref, w_ref, b_ref, o_ref, acc_ref, *,
                       drop_out, keep_threshold, k_total, tm, tk):
    """One (i, j, k) grid step of  y = dropout(x) @ W^T + b.

    seed_ref : SMEM scalar-prefetch ref, (1,), int32
    x_ref    : (tm, tk) VMEM tile of x
    w_ref    : (tn, tk) VMEM tile of W (torch layout: out x in)
    b_ref    : (1, tn)  VMEM tile of bias
    o_ref    : (tm, tn) VMEM output tile
    acc_ref  : (tm, tn) f32 VMEM accumulator scratch (resident across k)
    """
    i = pl.program_id(0)
    k = pl.program_id(2)

    @pl.when(k == 0)
    def _():
        acc_ref[...] = jnp.zeros_like(acc_ref)

    x = x_ref[...]

    if drop_out > 0.0:
        # Counter-based hash PRNG keyed on the *global* element index, so every
        # tile gets an independent, tiling-invariant mask.  Pure integer VPU
        # ops (one compare + one select per element); avoids pltpu.prng_seed /
        # prng_random_bits, which do not lower under the CPU interpreter.
        row = lax.broadcasted_iota(jnp.int32, x.shape, 0) + i * tm
        col = lax.broadcasted_iota(jnp.int32, x.shape, 1) + k * tk
        idx = (row * jnp.int32(k_total) + col).astype(jnp.uint32)
        seed_u = seed_ref[0].astype(jnp.uint32)
        h = idx ^ (seed_u * jnp.uint32(0x9E3779B9))
        h = (h ^ (h >> 16)) * jnp.uint32(0x7FEB352D)
        h = (h ^ (h >> 15)) * jnp.uint32(0x846CA68B)
        h = h ^ (h >> 16)
        keep = h >= jnp.uint32(keep_threshold)      # P(keep) = 1 - p
        x = jnp.where(keep, x, jnp.zeros_like(x))   # 1/(1-p) applied once, post-matmul

    # Contract against torch-layout weight (no wrapper-side transpose):
    # (tm, tk) x (tn, tk) contracted on dim 1 -> (tm, tn), f32 MXU accumulation.
    acc_ref[...] += lax.dot_general(
        x, w_ref[...],
        dimension_numbers=(((1,), (1,)), ((), ())),
        preferred_element_type=jnp.float32)

    @pl.when(k == pl.num_programs(2) - 1)
    def _():
        y = acc_ref[...]
        if drop_out > 0.0:
            y = y * jnp.float32(1.0 / (1.0 - drop_out))
        y = y + b_ref[...].astype(jnp.float32)      # bias added once, at finalize
        o_ref[...] = y.astype(o_ref.dtype)


def fully_connected_layer(x, weight, bias, *, drop_out=0.0, seed=0):
    """Pallas equivalent of FullyConnectedLayer.forward (training-mode dropout).

    x:      (B, input_dim)
    weight: (output_dim, input_dim)   -- torch nn.Linear layout (NOT transposed)
    bias:   (output_dim,)
    """
    assert 0.0 <= float(drop_out) < 1.0
    B, d_in = x.shape
    d_out, d_in_w = weight.shape
    assert d_in == d_in_w and bias.shape == (d_out,)

    # ---- tile sizing: VMEM-friendly on v5e/v6e/v7x, lane-dense output ----
    if B <= 256:
        tm = _round_up(B, 8)
        b_pad = tm
    else:
        tm = 256
        b_pad = _round_up(B, tm)

    if d_out < 128:
        tn = d_out                          # full-extent block for tiny layers
        n_pad = d_out
    else:
        tn = 256 if d_out % 256 == 0 else 128
        n_pad = _round_up(d_out, tn)        # keep output lanes 128-dense

    if d_in <= 512:
        tk = d_in                           # full-extent block
        k_pad = d_in
    else:
        tk = 512
        k_pad = _round_up(d_in, tk)

    xp = x if (b_pad == B and k_pad == d_in) else jnp.pad(
        x, ((0, b_pad - B), (0, k_pad - d_in)))
    wp = weight if (n_pad == d_out and k_pad == d_in) else jnp.pad(
        weight, ((0, n_pad - d_out), (0, k_pad - d_in)))
    bp = bias if n_pad == d_out else jnp.pad(bias, (0, n_pad - d_out))
    b2d = bp.reshape(1, n_pad)

    grid = (b_pad // tm, n_pad // tn, k_pad // tk)
    seed_arr = jnp.array([seed], dtype=jnp.int32)

    kernel = functools.partial(
        _fc_dropout_kernel,
        drop_out=float(drop_out),
        keep_threshold=min(int(round(float(drop_out) * 2.0 ** 32)), 2 ** 32 - 1),
        k_total=k_pad, tm=tm, tk=tk)

    out = pl.pallas_call(
        kernel,
        out_shape=jax.ShapeDtypeStruct((b_pad, n_pad), x.dtype),
        grid_spec=pltpu.PrefetchScalarGridSpec(
            num_scalar_prefetch=1,
            grid=grid,
            in_specs=[
                pl.BlockSpec((tm, tk), lambda i, j, k, s: (i, k)),   # x
                pl.BlockSpec((tn, tk), lambda i, j, k, s: (j, k)),   # W (out, in)
                pl.BlockSpec((1, tn), lambda i, j, k, s: (0, j)),    # bias
            ],
            out_specs=pl.BlockSpec((tm, tn), lambda i, j, k, s: (i, j)),
            scratch_shapes=[pltpu.VMEM((tm, tn), jnp.float32)],
        ),
        compiler_params=pltpu.CompilerParams(
            dimension_semantics=("parallel", "parallel", "arbitrary")),
    )(seed_arr, xp, wp, b2d)

    if b_pad != B or n_pad != d_out:
        out = out[:B, :d_out]
    return out


if __name__ == "__main__":
    # Small shapes implied by the module: batch=8, input_dim=32, output_dim=64
    B, D_IN, D_OUT = 8, 32, 64
    DROP_OUT = 0.1

    key = jax.random.PRNGKey(0)
    kx, kw, kb = jax.random.split(key, 3)

    x = jax.random.normal(kx, (B, D_IN), dtype=jnp.float32)
    # Deterministic nn.Linear-style init: U(-1/sqrt(fan_in), 1/sqrt(fan_in))
    bound = 1.0 / (D_IN ** 0.5)
    weight = jax.random.uniform(kw, (D_OUT, D_IN), jnp.float32, -bound, bound)
    bias = jax.random.uniform(kb, (D_OUT,), jnp.float32, -bound, bound)

    # Training-mode dropout path.
    y_train = fully_connected_layer(x, weight, bias, drop_out=DROP_OUT, seed=1234)
    jax.block_until_ready(y_train)
    assert y_train.shape == (B, D_OUT)
    assert bool(jnp.all(jnp.isfinite(y_train)))

    # Eval-mode (dropout disabled) vs plain-JAX reference.
    y_eval = fully_connected_layer(x, weight, bias, drop_out=0.0)
    jax.block_until_ready(y_eval)
    y_ref = jnp.dot(x, weight.T, precision=jax.lax.Precision.HIGHEST) + bias
    assert jnp.allclose(y_eval, y_ref, atol=2e-3, rtol=2e-3), "eval-mode mismatch"

    # Larger shape to exercise the tiled accumulator path + padding.
    B2, DIN2, DOUT2 = 200, 1024, 384
    k1, k2, k3 = jax.random.split(jax.random.PRNGKey(1), 3)
    x2 = jax.random.normal(k1, (B2, DIN2), dtype=jnp.float32)
    bnd2 = 1.0 / (DIN2 ** 0.5)
    w2 = jax.random.uniform(k2, (DOUT2, DIN2), jnp.float32, -bnd2, bnd2)
    bias2 = jax.random.uniform(k3, (DOUT2,), jnp.float32, -bnd2, bnd2)
    y2 = fully_connected_layer(x2, w2, bias2, drop_out=0.0)
    jax.block_until_ready(y2)
    y2_ref = jnp.dot(x2, w2.T, precision=jax.lax.Precision.HIGHEST) + bias2
    assert jnp.allclose(y2, y2_ref, atol=5e-2, rtol=5e-2), "tiled-path mismatch"

    print("KERNEL_OK")
</pallas_src>

<mosaic_0001>
module attributes {stable_mosaic.version = 11 : i64} {
  func.func @_fc_dropout_kernel(%arg0: i32, %arg1: i32, %arg2: i32, %arg3: memref<1xi32, #tpu.memory_space<smem>>, %arg4: memref<8x32xf32, #tpu.memory_space<vmem>>, %arg5: memref<64x32xf32, #tpu.memory_space<vmem>>, %arg6: memref<1x64xf32, #tpu.memory_space<vmem>>, %arg7: memref<8x64xf32, #tpu.memory_space<vmem>>, %arg8: memref<8x64xf32, #tpu.memory_space<vmem>>) attributes {dimension_semantics = [#tpu.dimension_semantics<parallel>, #tpu.dimension_semantics<parallel>, #tpu.dimension_semantics<arbitrary>], iteration_bounds = array<i64: 1, 1, 1>, scalar_prefetch = 1 : i64, scratch_operands = 1 : i64, tpu.core_type = #tpu.core_type<tc>, window_params = [{transform_indices = @transform_0, window_bounds = array<i64: 8, 32>}, {transform_indices = @transform_1, window_bounds = array<i64: 64, 32>}, {transform_indices = @transform_2, window_bounds = array<i64: 1, 64>}, {transform_indices = @transform_3, window_bounds = array<i64: 8, 64>}]} {
    %c0_i32 = arith.constant 0 : i32
    %0 = arith.cmpi eq, %arg2, %c0_i32 : i32
    %1 = arith.extui %0 : i1 to i32
    %c0_i32_0 = arith.constant 0 : i32
    %2 = arith.cmpi ne, %1, %c0_i32_0 : i32
    scf.if %2 {
      %cst_14 = arith.constant 0.000000e+00 : f32
      %44 = vector.broadcast %cst_14 : f32 to vector<8x64xf32>
      %c0_15 = arith.constant 0 : index
      %c0_16 = arith.constant 0 : index
      %45 = vector.load %arg8[%c0_15, %c0_16] : memref<8x64xf32, #tpu.memory_space<vmem>>, vector<8x64xf32>
      tpu.vector_store %arg8[%c0_15, %c0_16], %44 {strides = array<i32>} : memref<8x64xf32, #tpu.memory_space<vmem>>, vector<8x64xf32>,
    } else {
    }
    %c0 = arith.constant 0 : index
    %c0_1 = arith.constant 0 : index
    %3 = vector.load %arg4[%c0, %c0_1] : memref<8x32xf32, #tpu.memory_space<vmem>>, vector<8x32xf32>
    %4 = tpu.iota {dimensions = array<i32: 0>} : vector<8x32xi32>
    %c8_i32 = arith.constant 8 : i32
    %5 = arith.muli %arg0, %c8_i32 : i32
    %6 = vector.broadcast %5 : i32 to vector<8x32xi32>
    %7 = arith.addi %4, %6 : vector<8x32xi32>
    %8 = tpu.iota {dimensions = array<i32: 1>} : vector<8x32xi32>
    %c32_i32 = arith.constant 32 : i32
    %9 = arith.muli %arg2, %c32_i32 : i32
    %10 = vector.broadcast %9 : i32 to vector<8x32xi32>
    %11 = arith.addi %8, %10 : vector<8x32xi32>
    %c32_i32_2 = arith.constant 32 : i32
    %12 = vector.broadcast %c32_i32_2 : i32 to vector<8x32xi32>
    %13 = arith.muli %7, %12 : vector<8x32xi32>
    %14 = arith.addi %13, %11 : vector<8x32xi32>
    %c0_3 = arith.constant 0 : index
    %15 = memref.load %arg3[%c0_3] : memref<1xi32, #tpu.memory_space<smem>>
    %c-1640531527_i32 = arith.constant -1640531527 : i32
    %16 = arith.muli %15, %c-1640531527_i32 : i32
    %17 = vector.broadcast %16 : i32 to vector<8x32xi32>
    %18 = arith.xori %14, %17 : vector<8x32xi32>
    %c16_i32 = arith.constant 16 : i32
    %19 = vector.broadcast %c16_i32 : i32 to vector<8x32xi32>
    %20 = arith.shrui %18, %19 : vector<8x32xi32>
    %21 = arith.xori %18, %20 : vector<8x32xi32>
    %c2146121005_i32 = arith.constant 2146121005 : i32
    %22 = vector.broadcast %c2146121005_i32 : i32 to vector<8x32xi32>
    %23 = arith.muli %21, %22 : vector<8x32xi32>
    %c15_i32 = arith.constant 15 : i32
    %24 = vector.broadcast %c15_i32 : i32 to vector<8x32xi32>
    %25 = arith.shrui %23, %24 : vector<8x32xi32>
    %26 = arith.xori %23, %25 : vector<8x32xi32>
    %c-2073254261_i32 = arith.constant -2073254261 : i32
    %27 = vector.broadcast %c-2073254261_i32 : i32 to vector<8x32xi32>
    %28 = arith.muli %26, %27 : vector<8x32xi32>
    %c16_i32_4 = arith.constant 16 : i32
    %29 = vector.broadcast %c16_i32_4 : i32 to vector<8x32xi32>
    %30 = arith.shrui %28, %29 : vector<8x32xi32>
    %31 = arith.xori %28, %30 : vector<8x32xi32>
    %c429496730_i32 = arith.constant 429496730 : i32
    %32 = vector.broadcast %c429496730_i32 : i32 to vector<8x32xi32>
    %33 = arith.cmpi uge, %31, %32 : vector<8x32xi32>
    %cst = arith.constant 0.000000e+00 : f32
    %34 = vector.broadcast %cst : f32 to vector<8x32xf32>
    %35 = arith.select %33, %3, %34 : vector<8x32xi1>, vector<8x32xf32>
    %c0_5 = arith.constant 0 : index
    %c0_6 = arith.constant 0 : index
    %36 = vector.load %arg8[%c0_5, %c0_6] : memref<8x64xf32, #tpu.memory_space<vmem>>, vector<8x64xf32>
    %c0_7 = arith.constant 0 : index
    %c0_8 = arith.constant 0 : index
    %37 = vector.load %arg5[%c0_7, %c0_8] : memref<64x32xf32, #tpu.memory_space<vmem>>, vector<64x32xf32>
    %cst_9 = arith.constant dense<0.000000e+00> : vector<8x64xf32>
    %38 = tpu.matmul %35, %37, %cst_9 {dimension_numbers = #tpu.dot_dimension_numbers<[1], [1], [0], [0], [0, 0, 1, 0], [], []>} : vector<8x32xf32>, vector<64x32xf32>, vector<8x64xf32> -> vector<8x64xf32>
    %39 = arith.addf %36, %38 : vector<8x64xf32>
    %c0_10 = arith.constant 0 : index
    %c0_11 = arith.constant 0 : index
    %40 = vector.load %arg8[%c0_10, %c0_11] : memref<8x64xf32, #tpu.memory_space<vmem>>, vector<8x64xf32>
    tpu.vector_store %arg8[%c0_10, %c0_11], %39 {strides = array<i32>} : memref<8x64xf32, #tpu.memory_space<vmem>>, vector<8x64xf32>,
    %c0_i32_12 = arith.constant 0 : i32
    %41 = arith.cmpi eq, %arg2, %c0_i32_12 : i32
    %42 = arith.extui %41 : i1 to i32
    %c0_i32_13 = arith.constant 0 : i32
    %43 = arith.cmpi ne, %42, %c0_i32_13 : i32
    scf.if %43 {
      %c0_14 = arith.constant 0 : index
      %c0_15 = arith.constant 0 : index
      %44 = vector.load %arg8[%c0_14, %c0_15] : memref<8x64xf32, #tpu.memory_space<vmem>>, vector<8x64xf32>
      %cst_16 = arith.constant 1.11111116 : f32
      %45 = vector.broadcast %cst_16 : f32 to vector<8x64xf32>
      %46 = arith.mulf %44, %45 : vector<8x64xf32>
      %c0_17 = arith.constant 0 : index
      %c0_18 = arith.constant 0 : index
      %47 = vector.load %arg6[%c0_17, %c0_18] : memref<1x64xf32, #tpu.memory_space<vmem>>, vector<1x64xf32>
      %48 = vector.broadcast %47 : vector<1x64xf32> to vector<8x64xf32>
      %49 = arith.addf %46, %48 : vector<8x64xf32>
      %c0_19 = arith.constant 0 : index
      %c0_20 = arith.constant 0 : index
      %50 = vector.load %arg7[%c0_19, %c0_20] : memref<8x64xf32, #tpu.memory_space<vmem>>, vector<8x64xf32>
      tpu.vector_store %arg7[%c0_19, %c0_20], %49 {strides = array<i32>} : memref<8x64xf32, #tpu.memory_space<vmem>>, vector<8x64xf32>,
    } else {
    }
    return
  }
  func.func @transform_0(%arg0: i32, %arg1: i32, %arg2: i32, %arg3: memref<1xi32, #tpu.memory_space<smem>>) -> (i32, i32) {
    %c0_i32 = arith.constant 0 : i32
    return %arg0, %arg2 : i32, i32
  }
  func.func @transform_1(%arg0: i32, %arg1: i32, %arg2: i32, %arg3: memref<1xi32, #tpu.memory_space<smem>>) -> (i32, i32) {
    %c0_i32 = arith.constant 0 : i32
    return %arg1, %arg2 : i32, i32
  }
  func.func @transform_2(%arg0: i32, %arg1: i32, %arg2: i32, %arg3: memref<1xi32, #tpu.memory_space<smem>>) -> (i32, i32) {
    %c0_i32 = arith.constant 0 : i32
    %c0_i32_0 = arith.constant 0 : i32
    return %c0_i32, %arg1 : i32, i32
  }
  func.func @transform_3(%arg0: i32, %arg1: i32, %arg2: i32, %arg3: memref<1xi32, #tpu.memory_space<smem>>) -> (i32, i32) {
    %c0_i32 = arith.constant 0 : i32
    return %arg0, %arg1 : i32, i32
  }
}

</mosaic_0001>

<llo_original>
// kernel: tpu_custom_call.1
$region0: #{tpu_custom_call.1}
  #allocation0 [shape = 'u32[]', space=smem, size = 0x4, offset = 0x4, fixed_abs, tag = 'smem constant byte address 0x4 - core index']
  #allocation1 [shape = 'u32[144,128]{1,0:T(1,128)}', space=vmem, size = 0x12000, scoped, tag = 'internal scratch']
  #allocation2 [shape = 'f32[8,64]{1,0:T(8,128)}', space=vmem, size = 0x1000, scoped, tag = 'scratch operand']
  #allocation3 [shape = 's32[1]{0}', space=sflag, size = 0x4, scoped, tag = 'scoped memory for tpu_custom_call.1']
  #allocation4 [shape = 's32[1]{0:T(128)S(6)}', space=smem, size = 0x200, scoped, tag = 'prefetched SMEM operand 0']
  %s0 = inlined_call_operand.<no memory space> [shape: s32[1], index: 0, kind: input, shape index: {}]
  %s1 = inlined_call_operand.vmem [shape: f32[8,32], index: 1, kind: input, shape index: {}]
  %s2 = inlined_call_operand.vmem [shape: f32[64,32], index: 2, kind: input, shape index: {}]
  %s3 = inlined_call_operand.vmem [shape: f32[1,64], index: 3, kind: input, shape index: {}]
  %s4 = inlined_call_operand.hbm [shape: f32[8,64], index: 4, kind: output, shape index: {}]
  %s5 = sld [smem:[#allocation0]]
  $region30: #{tpu_custom_call.1} parent=0
    _
  %s7 = ssub.s32 1, %s5
  %s8 = scalar_select 0, %s7, %s5
  %9 = sst [smem:[#allocation4]] %s0
  $region1: #{tpu_custom_call.1} parent=0
    #allocation5 [shape = 'u8[4096]{0}', space=vmem, size = 0x1000, scoped, tag = 'output window, operand 0, single buffered']
    #allocation6 [shape = 's32[1]{0}', space=sflag, size = 0x4, scoped, tag = 'scoped memory for tpu_custom_call.1']
    %10 = vsyncpa [#allocation6], 0
    // Predicated region
    $region2: #{tpu_custom_call.1} parent=1 // pred_check
      _
    $region3: #{tpu_custom_call.1} parent=1 // pred_check_branch
      %12 = sbr.rel (0) target = $region5
    $region4: #{tpu_custom_call.1} parent=1 // pred_region
      _
    $region5: #{tpu_custom_call.1} parent=1 // pred_fallthru
      _
    // Predicated region
    $region6: #{tpu_custom_call.1} parent=1 // pred_check
      _
    $region7: #{tpu_custom_call.1} parent=1 // pred_check_branch
      %14 = sbr.rel (0) target = $region9
    $region8: #{tpu_custom_call.1} parent=1 // pred_region
      _
    $region9: #{tpu_custom_call.1} parent=1 // pred_fallthru
      _
    // Predicated region
    $region10: #{tpu_custom_call.1} parent=1 // pred_check
      _
    $region11: #{tpu_custom_call.1} parent=1 // pred_check_branch
      %16 = sbr.rel (0) target = $region13
    $region12: #{tpu_custom_call.1} parent=1 // pred_region
      _
    $region13: #{tpu_custom_call.1} parent=1 // pred_fallthru
      _
    %p17 = scmp.eq.s32.totalorder 0, 0
    // Predicated region
    $region14: #{tpu_custom_call.1} parent=1 // pred_check
      %p18 = pneg %p17
    $region15: #{tpu_custom_call.1} parent=1 // pred_check_branch
      %20 = sbr.rel (%p18) target = $region17
    $region16: #{tpu_custom_call.1} parent=1 // pred_region
      %vm21 = vcmask 523264
      %22 = vst.msk [vmem:[#allocation2] sm:$0xff] %vm21, 0.0
    $region17: #{tpu_custom_call.1} parent=1 // pred_fallthru
      _
    %v23 = vld [vmem:[%s1] sm:$0xff]
    %v24 = vlaneseq
    %v25 = vshrl.u32 %v24, 7
    %s26 = smul.u32 0, 8
    %v27 = vstv %s26
    %v28 = vadd.s32 %v25, %v27
    %v29 = vlaneseq
    %v30 = vand.u32 %v29, 127
    %s31 = smul.u32 0, 32
    %v32 = vstv %s31
    %v33 = vadd.s32 %v30, %v32
    %v34 = vmul.u32 %v28, 32
    %v35 = vadd.s32 %v34, %v33
    %s36 = sld [smem:[#allocation4]]
    %s37 = smul.u32 %s36, 2654435769
    %v38 = vstv %s37
    %v39 = vxor.u32 %v35, %v38
    %v40 = vshrl.u32 %v39, 16
    %v41 = vxor.u32 %v39, %v40
    %v42 = vmul.u32 %v41, 2146121005
    %v43 = vshrl.u32 %v42, 15
    %v44 = vxor.u32 %v42, %v43
    %v45 = vmul.u32 %v44, 2221713035
    %v46 = vshrl.u32 %v45, 16
    %v47 = vxor.u32 %v45, %v46
    %vm48 = vcmp.ge.u32.totalorder %v47, 429496730
    %v49 = vsel %vm48, %v23, 0.0
    %v50 = vld [vmem:[#allocation2] sm:$0xff]
    %v51 = vld [vmem:[%s2] sm:$0xff]
    %v52 = vld [vmem:[%s2 + $0x8] sm:$0xff]
    %v53 = vld [vmem:[%s2 + $0x10] sm:$0xff]
    %v54 = vld [vmem:[%s2 + $0x18] sm:$0xff]
    %v55 = vld [vmem:[%s2 + $0x20] sm:$0xff]
    %v56 = vld [vmem:[%s2 + $0x28] sm:$0xff]
    %v57 = vld [vmem:[%s2 + $0x30] sm:$0xff]
    %v58 = vld [vmem:[%s2 + $0x38] sm:$0xff]
    %vm59 = vcmask 261120
    %v61 = vsel %vm59, %v49, 0
    %v64 = vsel %vm59, %v51, 0
    %v67 = vsel %vm59, %v52, 0
    %v70 = vsel %vm59, %v53, 0
    %v73 = vsel %vm59, %v54, 0
    %v76 = vsel %vm59, %v55, 0
    %v79 = vsel %vm59, %v56, 0
    %v82 = vsel %vm59, %v57, 0
    %v85 = vsel %vm59, %v58, 0
    %87 = vmatprep.subr.mxu0 0.0
    %88 = vmatpush1.xpose.msra.mxu0 %v64
    %89 = vmatprep.subr.mxu0 0.0
    %90 = vmatpush1.xpose.msra.mxu0 %v67
    %91 = vmatprep.subr.mxu0 0.0
    %92 = vmatpush1.xpose.msra.mxu0 %v70
    %93 = vmatprep.subr.mxu0 0.0
    %94 = vmatpush1.xpose.msra.mxu0 %v73
    %95 = vmatprep.subr.mxu0 0.0
    %96 = vmatpush1.xpose.msra.mxu0 %v76
    %97 = vmatprep.subr.mxu0 0.0
    %98 = vmatpush1.xpose.msra.mxu0 %v79
    %99 = vmatprep.subr.mxu0 0.0
    %100 = vmatpush1.xpose.msra.mxu0 %v82
    %101 = vmatprep.subr.mxu0 0.0
    %102 = vmatpush1.xpose.msra.mxu0 %v85
    %103 = vmatprep.subr.mxu0 0.0
    %104 = vmatpush1.xpose.msra.mxu0 0.0
    %105 = vmatprep.subr.mxu0 0.0
    %106 = vmatpush1.xpose.msra.mxu0 0.0
    %107 = vmatprep.subr.mxu0 0.0
    %108 = vmatpush1.xpose.msra.mxu0 0.0
    %109 = vmatprep.subr.mxu0 0.0
    %110 = vmatpush1.xpose.msra.mxu0 0.0
    %111 = vmatprep.subr.mxu0 0.0
    %112 = vmatpush1.xpose.msra.mxu0 0.0
    %113 = vmatprep.subr.mxu0 0.0
    %114 = vmatpush1.xpose.msra.mxu0 0.0
    %115 = vmatprep.subr.mxu0 0.0
    %116 = vmatpush1.xpose.msra.mxu0 0.0
    %117 = vmatprep.subr.mxu0 0.0
    %118 = vmatpush1.xpose.msra.mxu0 0.0
    %119 = vmatprep.subr.mxu0 0.0
    %120 = vmatpush1.xpose.msra.mxu0 0.0
    %121 = vmatprep.subr.mxu0 0.0
    %122 = vmatpush1.xpose.msra.mxu0 0.0
    %123 = vmatprep.subr.mxu0 0.0
    %124 = vmatpush1.xpose.msra.mxu0 0.0
    %125 = vmatprep.subr.mxu0 0.0
    %126 = vmatpush1.xpose.msra.mxu0 0.0
    %127 = vmatprep.subr.mxu0 0.0
    %128 = vmatpush1.xpose.msra.mxu0 0.0
    %129 = vmatprep.subr.mxu0 0.0
    %130 = vmatpush1.xpose.msra.mxu0 0.0
    %131 = vmatprep.subr.mxu0 0.0
    %132 = vmatpush1.xpose.msra.mxu0 0.0
    %133 = vmatprep.subr.mxu0 0.0
    %134 = vmatpush1.xpose.msra.mxu0 0.0
    %135 = vmatprep.subr.mxu0 0.0
    %136 = vmatpush1.xpose.msra.mxu0 0.0
    %137 = vmatprep.subr.mxu0 0.0
    %138 = vmatpush1.xpose.msra.mxu0 0.0
    %139 = vmatprep.subr.mxu0 0.0
    %140 = vmatpush1.xpose.msra.mxu0 0.0
    %141 = vmatprep.subr.mxu0 0.0
    %142 = vmatpush1.xpose.msra.mxu0 0.0
    %143 = vmatprep.subr.mxu0 0.0
    %144 = vmatpush1.xpose.msra.mxu0 0.0
    %145 = vmatprep.subr.mxu0 0.0
    %146 = vmatpush1.xpose.msra.mxu0 0.0
    %147 = vmatprep.subr.mxu0 0.0
    %148 = vmatpush1.xpose.msra.mxu0 0.0
    %149 = vmatprep.subr.mxu0 0.0
    %150 = vmatpush1.xpose.msra.mxu0 0.0
    %151 = vmatprep.mubr.f32.mxu0 0.0
    %152 = vmatmul.mubr.f32.gmra.mrb[0].mxu0 %v61
    %v153 = vpop.f32.mrb[0].mxu0
    %v154 = vadd.f32 0.0, %v153
    %v155 = vpop.f32.mrb[0].mxu0
    %156 = vdwg.mxu0
    %v157 = vadd.f32 %v50, %v154
    %vm158 = vcmask 523264
    %159 = vst.msk [vmem:[#allocation2] sm:$0xff] %vm158, %v157
    // Predicated region
    $region18: #{tpu_custom_call.1} parent=1 // pred_check
      %p160 = pneg %p17
    $region19: #{tpu_custom_call.1} parent=1 // pred_check_branch
      %162 = sbr.rel (%p160) target = $region21
    $region20: #{tpu_custom_call.1} parent=1 // pred_region
      %v163 = vld [vmem:[#allocation2] sm:$0xff]
      %v164 = vmul.f32 %v163, 1.1111112
      %v165 = vld [vmem:[%s3] sm:$0x1]
      %v167 = vlaneseq
      %v168 = vshrl.u32 %v167, 7
      %v169 = vsub.s32 0, %v168
      %v170 = vrot.slane %v165, %v169
      %v172 = vadd.f32 %v164, %v170
      %173 = vst.msk [vmem:[#allocation5] sm:$0xff] %vm158, %v172
    $region21: #{tpu_custom_call.1} parent=1 // pred_fallthru
      _
    // Predicated region
    $region22: #{tpu_custom_call.1} parent=1 // pred_check
      _
    $region23: #{tpu_custom_call.1} parent=1 // pred_check_branch
      %175 = sbr.rel (0) target = $region25
    $region24: #{tpu_custom_call.1} parent=1 // pred_region
      %s177 = ssub.s32 128, 128
      %178 = vsyncadd [#allocation6], %s177
      %s180 = sshll.u32 [#allocation5], 4
      %s181 = int_to_ptr.vmem [resolvable:$true] %s180
      %183 = dma.vmem_to_hbm [thread:$0]  %s181, 128, %s4, [#allocation6]
    $region25: #{tpu_custom_call.1} parent=1 // pred_fallthru
      _
    // Predicated region
    $region26: #{tpu_custom_call.1} parent=1 // pred_check
      _
    $region27: #{tpu_custom_call.1} parent=1 // pred_check_branch
      %185 = sbr.rel (0) target = $region29
    $region28: #{tpu_custom_call.1} parent=1 // pred_region
      %186 = dma.done [#allocation6], 128
    $region29: #{tpu_custom_call.1} parent=1 // pred_fallthru
      _
    %187 = vsyncpa [#allocation6], 1

</llo_original>
